<compile_context>
chip_gen: v6e
topology: v6e:2x2x1
jax: 0.10.0
libtpu: 0.0.40
codegen_flags: <defaults>
</compile_context>

<pallas_src>
import functools

import jax
import jax.numpy as jnp
from jax.experimental import pallas as pl
from jax.experimental.pallas import tpu as pltpu


def _round_up(x, m):
    return ((x + m - 1) // m) * m


# ----------------------------------------------------------------------------
# Kernel
# ----------------------------------------------------------------------------
def _actor_kernel(state_ref, wstate_ref, wrest_ref, bias_ref, out_ref, *,
                  num_hidden, hp, act_pad, wx_offs, wout_off, max_action):
    state_bf = state_ref[...].astype(jnp.bfloat16)            # [Bt, obs]

    # Hoisted: every state-path matmul (including the input layer) in one
    # MXU issue, off the serial x-chain.
    s_all = jnp.dot(state_bf, wstate_ref[...],
                    preferred_element_type=jnp.float32)        # [Bt, (1+nh)*Hp]

    # Full-lane f32 bias rows, loaded once (hoisted out of the layer loop).
    b = bias_ref[...]                                          # [rows, lane]

    # Input layer: relu(state @ W_in + b_in).  Lanes H..Hp stay exactly zero.
    x = jnp.maximum(s_all[:, 0:hp] + b[0:1, :hp], 0.0)         # [Bt, Hp] f32

    # Dense-connection hidden layers:
    #   concat([x, state]) @ W  ==  x @ W_x + state @ W_s  (state part above).
    for i in range(num_hidden):
        w_x = wrest_ref[wx_offs[i]:wx_offs[i] + hp, :hp]       # [Hp, Hp] bf16
        s_i = s_all[:, (i + 1) * hp:(i + 2) * hp]              # 128-lane aligned
        x = jnp.maximum(
            jnp.dot(x.astype(jnp.bfloat16), w_x,
                    preferred_element_type=jnp.float32)
            + s_i + b[1 + i:2 + i, :hp],
            0.0)

    # Output layer + tanh * max_action (lane-dense padded output).
    w_out = wrest_ref[wout_off:wout_off + hp, :act_pad]
    out = jnp.dot(x.astype(jnp.bfloat16), w_out,
                  preferred_element_type=jnp.float32)
    out = out + b[1 + num_hidden:2 + num_hidden, :act_pad]
    out_ref[...] = jnp.tanh(out) * max_action


# ----------------------------------------------------------------------------
# Weight packing (done once, outside the per-step call)
# ----------------------------------------------------------------------------
def pack_params(params, obs_size, act_size, hidden_size, num_hidden_layers=3):
    H = hidden_size
    nh = num_hidden_layers
    Hp = _round_up(max(H, 128), 128)                 # hidden width, lane-dense
    act_pad = _round_up(max(act_size, 128), 128)     # output width, lane-dense
    lane_rest = max(Hp, act_pad)

    # ---- state-path slab: [ W_in | W_h0_s | ... ], each block Hp lanes ----
    obs_rows = _round_up(obs_size, 16)               # bf16 sublane tile height
    wstate = jnp.zeros((obs_rows, (nh + 1) * Hp), jnp.bfloat16)
    wstate = wstate.at[:obs_size, :H].set(params["w_in"].astype(jnp.bfloat16))
    for i in range(nh):
        c0 = (i + 1) * Hp
        wstate = wstate.at[:obs_size, c0:c0 + H].set(
            params[f"w_h{i}_s"].astype(jnp.bfloat16))

    # ---- x-path + output weights: Hp-row slabs in a 128-lane buffer ----
    wrest = jnp.zeros(((nh + 1) * Hp, lane_rest), jnp.bfloat16)
    wx_offs = []
    for i in range(nh):
        r0 = i * Hp
        wx_offs.append(r0)
        wrest = wrest.at[r0:r0 + H, :H].set(
            params[f"w_h{i}_x"].astype(jnp.bfloat16))
    wout_off = nh * Hp
    wrest = wrest.at[wout_off:wout_off + H, :act_size].set(
        params["w_out"].astype(jnp.bfloat16))

    # ---- biases: f32 full-lane rows (padding lanes are zero) ----
    brows = _round_up(2 + nh, 8)
    bpack = jnp.zeros((brows, lane_rest), jnp.float32)
    bpack = bpack.at[0, :H].set(params["b_in"][0])
    for i in range(nh):
        bpack = bpack.at[1 + i, :H].set(params[f"b_h{i}"][0])
    bpack = bpack.at[1 + nh, :act_size].set(params["b_out"][0])

    meta = dict(obs=obs_size, act=act_size, act_pad=act_pad, hidden=H, hp=Hp,
                num_hidden=nh, wx_offs=tuple(wx_offs), wout_off=wout_off)
    return wstate, wrest, bpack, meta


# ----------------------------------------------------------------------------
# Batch tiling (generation-aware)
# ----------------------------------------------------------------------------
def _batch_tiling(B):
    B_pad = _round_up(B, 8)
    kind = ""
    try:
        kind = jax.devices()[0].device_kind.lower()
    except Exception:
        pass
    dual_tc = "v7" in kind                      # v7x: 2 TensorCores per chip
    cap = 1024                                  # amortize ~0.35us per grid step

    if dual_tc and B_pad >= 16:
        # >=2 grid steps so both TensorCores get work on the "parallel" axis.
        B_tile = min(_round_up((B_pad + 1) // 2, 8), cap)
    elif B_pad > cap:
        B_tile = cap
    else:
        B_tile = B_pad                          # single-TC: one big tile
    B_pad = _round_up(B_pad, B_tile)
    return B_pad, B_tile


# ----------------------------------------------------------------------------
# Wrapper
# ----------------------------------------------------------------------------
def actor_forward(state, wstate, wrest, bpack, meta, max_action):
    B, obs = state.shape
    assert obs == meta["obs"]
    act, act_pad, Hp = meta["act"], meta["act_pad"], meta["hp"]

    B_pad, B_tile = _batch_tiling(B)
    state_p = state
    if B_pad != B:
        state_p = jnp.zeros((B_pad, obs), state.dtype).at[:B].set(state)

    kernel = functools.partial(
        _actor_kernel,
        num_hidden=meta["num_hidden"], hp=Hp, act_pad=act_pad,
        wx_offs=meta["wx_offs"], wout_off=meta["wout_off"],
        max_action=float(max_action))

    # Rough VMEM estimate: double-buffered batch-gridded operands + weights.
    vmem_est = (2 * B_tile * (obs + act_pad) * 4
                + 2 * int(wstate.size) * 2
                + 2 * int(wrest.size) * 2
                + 2 * int(bpack.size) * 4)
    cp_kwargs = dict(dimension_semantics=("parallel",))
    if vmem_est > (30 << 20):
        cp_kwargs["vmem_limit_bytes"] = int(min(vmem_est + (8 << 20), 48 << 20))

    out = pl.pallas_call(
        kernel,
        out_shape=jax.ShapeDtypeStruct((B_pad, act_pad), jnp.float32),
        grid=(B_pad // B_tile,),
        in_specs=[
            pl.BlockSpec((B_tile, obs), lambda i: (i, 0)),
            pl.BlockSpec(wstate.shape, lambda i: (0, 0)),   # invariant blocks
            pl.BlockSpec(wrest.shape, lambda i: (0, 0)),
            pl.BlockSpec(bpack.shape, lambda i: (0, 0)),
        ],
        out_specs=pl.BlockSpec((B_tile, act_pad), lambda i: (i, 0)),
        compiler_params=pltpu.CompilerParams(**cp_kwargs),
    )(state_p, wstate, wrest, bpack)

    return out[:B, :act]


# ----------------------------------------------------------------------------
# Params / references
# ----------------------------------------------------------------------------
def init_params(key, obs_size, act_size, hidden_size, num_hidden_layers=3):
    """Deterministic synthetic init. Weights stored in kernel layout [in, out]."""
    params = {}
    k = key

    def nxt():
        nonlocal k
        k, sub = jax.random.split(k)
        return sub

    def linear(in_f, out_f):
        bound = 1.0 / jnp.sqrt(jnp.float32(in_f))
        w = jax.random.uniform(nxt(), (in_f, out_f), jnp.float32, -bound, bound)
        b = jax.random.uniform(nxt(), (1, out_f), jnp.float32, -bound, bound)
        return w, b

    params["w_in"], params["b_in"] = linear(obs_size, hidden_size)
    for i in range(num_hidden_layers):
        w, b = linear(hidden_size + obs_size, hidden_size)
        params[f"w_h{i}_x"] = w[:hidden_size, :]
        params[f"w_h{i}_s"] = w[hidden_size:, :]
        params[f"b_h{i}"] = b
    params["w_out"], params["b_out"] = linear(hidden_size, act_size)
    return params


def actor_reference(state, params, max_action, num_hidden_layers=3):
    """Pure-JAX f32 reference matching the PyTorch forward."""
    x = jax.nn.relu(state @ params["w_in"] + params["b_in"])
    for i in range(num_hidden_layers):
        x = jnp.concatenate([x, state], axis=1)
        w = jnp.concatenate([params[f"w_h{i}_x"], params[f"w_h{i}_s"]], axis=0)
        x = jax.nn.relu(x @ w + params[f"b_h{i}"])
    out = x @ params["w_out"] + params["b_out"]
    return jnp.tanh(out) * max_action


def actor_reference_bf16(state, params, max_action, num_hidden_layers=3):
    """Reference with the same bf16-input / f32-accumulate matmul precision."""
    def d(a, b):
        return jnp.dot(a.astype(jnp.bfloat16), b.astype(jnp.bfloat16),
                       preferred_element_type=jnp.float32)
    x = jax.nn.relu(d(state, params["w_in"]) + params["b_in"])
    for i in range(num_hidden_layers):
        w = jnp.concatenate([params[f"w_h{i}_x"], params[f"w_h{i}_s"]], axis=0)
        x = jax.nn.relu(d(jnp.concatenate([x, state], axis=1), w) + params[f"b_h{i}"])
    out = d(x, params["w_out"]) + params["b_out"]
    return jnp.tanh(out) * max_action


if __name__ == "__main__":
    obs_size, act_size, hidden_size = 16, 8, 32
    max_action = 2.0
    batch = 2

    key = jax.random.PRNGKey(0)
    pkey, skey = jax.random.split(key)
    params = init_params(pkey, obs_size, act_size, hidden_size)
    state = jax.random.normal(skey, (batch, obs_size), jnp.float32)

    wstate, wrest, bpack, meta = pack_params(params, obs_size, act_size,
                                             hidden_size)

    action = actor_forward(state, wstate, wrest, bpack, meta, max_action)
    action = jax.block_until_ready(action)
    assert action.shape == (batch, act_size)

    # tight check against a reference with matching bf16-MXU / f32-acc precision
    ref_bf16 = actor_reference_bf16(state, params, max_action)
    assert jnp.allclose(action, ref_bf16, atol=2e-3, rtol=2e-3), \
        "mismatch vs bf16-precision reference"

    # loose check against the exact f32 PyTorch-equivalent reference
    ref_f32 = actor_reference(state, params, max_action)
    assert jnp.allclose(action, ref_f32, atol=5e-2, rtol=5e-2), \
        "mismatch vs f32 reference"

    print("KERNEL_OK")
</pallas_src>

<mosaic_0001>
module attributes {stable_mosaic.version = 11 : i64} {
  func.func @_actor_kernel(%arg0: i32, %arg1: memref<8x16xf32, #tpu.memory_space<vmem>>, %arg2: memref<16x512xbf16, #tpu.memory_space<vmem>>, %arg3: memref<512x128xbf16, #tpu.memory_space<vmem>>, %arg4: memref<8x128xf32, #tpu.memory_space<vmem>>, %arg5: memref<8x128xf32, #tpu.memory_space<vmem>>) attributes {dimension_semantics = [#tpu.dimension_semantics<parallel>], iteration_bounds = array<i64: 1>, scalar_prefetch = 0 : i64, scratch_operands = 0 : i64, tpu.core_type = #tpu.core_type<tc>, window_params = [{transform_indices = @transform_0, window_bounds = array<i64: 8, 16>}, {pipeline_mode = #tpu.pipeline_mode<synchronous>, transform_indices = @transform_1, window_bounds = array<i64: 16, 512>}, {pipeline_mode = #tpu.pipeline_mode<synchronous>, transform_indices = @transform_2, window_bounds = array<i64: 512, 128>}, {pipeline_mode = #tpu.pipeline_mode<synchronous>, transform_indices = @transform_3, window_bounds = array<i64: 8, 128>}, {transform_indices = @transform_4, window_bounds = array<i64: 8, 128>}]} {
    %c0 = arith.constant 0 : index
    %c0_0 = arith.constant 0 : index
    %0 = vector.load %arg1[%c0, %c0_0] : memref<8x16xf32, #tpu.memory_space<vmem>>, vector<8x16xf32>
    %1 = arith.truncf %0 : vector<8x16xf32> to vector<8x16xbf16>
    %c0_1 = arith.constant 0 : index
    %c0_2 = arith.constant 0 : index
    %2 = vector.load %arg2[%c0_1, %c0_2] : memref<16x512xbf16, #tpu.memory_space<vmem>>, vector<16x512xbf16>
    %cst = arith.constant dense<0.000000e+00> : vector<8x512xf32>
    %3 = tpu.matmul %1, %2, %cst {dimension_numbers = #tpu.dot_dimension_numbers<[1], [0], [0], [1], [0, 0, 1, 1], [], []>} : vector<8x16xbf16>, vector<16x512xbf16>, vector<8x512xf32> -> vector<8x512xf32>
    %c0_3 = arith.constant 0 : index
    %c0_4 = arith.constant 0 : index
    %4 = vector.load %arg4[%c0_3, %c0_4] : memref<8x128xf32, #tpu.memory_space<vmem>>, vector<8x128xf32>
    %5 = vector.extract_strided_slice %3 {offsets = [0, 0], sizes = [8, 128], strides = [1, 1]} : vector<8x512xf32> to vector<8x128xf32>
    %6 = vector.extract_strided_slice %4 {offsets = [0, 0], sizes = [1, 128], strides = [1, 1]} : vector<8x128xf32> to vector<1x128xf32>
    %7 = vector.broadcast %6 : vector<1x128xf32> to vector<8x128xf32>
    %8 = arith.addf %5, %7 : vector<8x128xf32>
    %cst_5 = arith.constant 0.000000e+00 : f32
    %9 = vector.broadcast %cst_5 : f32 to vector<8x128xf32>
    %10 = arith.maximumf %8, %9 : vector<8x128xf32>
    %c0_6 = arith.constant 0 : index
    %c0_7 = arith.constant 0 : index
    %11 = vector.load %arg3[%c0_6, %c0_7] : memref<512x128xbf16, #tpu.memory_space<vmem>>, vector<128x128xbf16>
    %12 = vector.extract_strided_slice %3 {offsets = [0, 128], sizes = [8, 128], strides = [1, 1]} : vector<8x512xf32> to vector<8x128xf32>
    %13 = arith.truncf %10 : vector<8x128xf32> to vector<8x128xbf16>
    %cst_8 = arith.constant dense<0.000000e+00> : vector<8x128xf32>
    %14 = tpu.matmul %13, %11, %cst_8 {dimension_numbers = #tpu.dot_dimension_numbers<[1], [0], [0], [1], [0, 0, 1, 1], [], []>} : vector<8x128xbf16>, vector<128x128xbf16>, vector<8x128xf32> -> vector<8x128xf32>
    %15 = arith.addf %14, %12 : vector<8x128xf32>
    %16 = vector.extract_strided_slice %4 {offsets = [1, 0], sizes = [1, 128], strides = [1, 1]} : vector<8x128xf32> to vector<1x128xf32>
    %17 = vector.broadcast %16 : vector<1x128xf32> to vector<8x128xf32>
    %18 = arith.addf %15, %17 : vector<8x128xf32>
    %cst_9 = arith.constant 0.000000e+00 : f32
    %19 = vector.broadcast %cst_9 : f32 to vector<8x128xf32>
    %20 = arith.maximumf %18, %19 : vector<8x128xf32>
    %c128 = arith.constant 128 : index
    %c0_10 = arith.constant 0 : index
    %21 = vector.load %arg3[%c128, %c0_10] : memref<512x128xbf16, #tpu.memory_space<vmem>>, vector<128x128xbf16>
    %22 = vector.extract_strided_slice %3 {offsets = [0, 256], sizes = [8, 128], strides = [1, 1]} : vector<8x512xf32> to vector<8x128xf32>
    %23 = arith.truncf %20 : vector<8x128xf32> to vector<8x128xbf16>
    %cst_11 = arith.constant dense<0.000000e+00> : vector<8x128xf32>
    %24 = tpu.matmul %23, %21, %cst_11 {dimension_numbers = #tpu.dot_dimension_numbers<[1], [0], [0], [1], [0, 0, 1, 1], [], []>} : vector<8x128xbf16>, vector<128x128xbf16>, vector<8x128xf32> -> vector<8x128xf32>
    %25 = arith.addf %24, %22 : vector<8x128xf32>
    %26 = vector.extract_strided_slice %4 {offsets = [2, 0], sizes = [1, 128], strides = [1, 1]} : vector<8x128xf32> to vector<1x128xf32>
    %27 = vector.broadcast %26 : vector<1x128xf32> to vector<8x128xf32>
    %28 = arith.addf %25, %27 : vector<8x128xf32>
    %cst_12 = arith.constant 0.000000e+00 : f32
    %29 = vector.broadcast %cst_12 : f32 to vector<8x128xf32>
    %30 = arith.maximumf %28, %29 : vector<8x128xf32>
    %c256 = arith.constant 256 : index
    %c0_13 = arith.constant 0 : index
    %31 = vector.load %arg3[%c256, %c0_13] : memref<512x128xbf16, #tpu.memory_space<vmem>>, vector<128x128xbf16>
    %32 = vector.extract_strided_slice %3 {offsets = [0, 384], sizes = [8, 128], strides = [1, 1]} : vector<8x512xf32> to vector<8x128xf32>
    %33 = arith.truncf %30 : vector<8x128xf32> to vector<8x128xbf16>
    %cst_14 = arith.constant dense<0.000000e+00> : vector<8x128xf32>
    %34 = tpu.matmul %33, %31, %cst_14 {dimension_numbers = #tpu.dot_dimension_numbers<[1], [0], [0], [1], [0, 0, 1, 1], [], []>} : vector<8x128xbf16>, vector<128x128xbf16>, vector<8x128xf32> -> vector<8x128xf32>
    %35 = arith.addf %34, %32 : vector<8x128xf32>
    %36 = vector.extract_strided_slice %4 {offsets = [3, 0], sizes = [1, 128], strides = [1, 1]} : vector<8x128xf32> to vector<1x128xf32>
    %37 = vector.broadcast %36 : vector<1x128xf32> to vector<8x128xf32>
    %38 = arith.addf %35, %37 : vector<8x128xf32>
    %cst_15 = arith.constant 0.000000e+00 : f32
    %39 = vector.broadcast %cst_15 : f32 to vector<8x128xf32>
    %40 = arith.maximumf %38, %39 : vector<8x128xf32>
    %c384 = arith.constant 384 : index
    %c0_16 = arith.constant 0 : index
    %41 = vector.load %arg3[%c384, %c0_16] : memref<512x128xbf16, #tpu.memory_space<vmem>>, vector<128x128xbf16>
    %42 = arith.truncf %40 : vector<8x128xf32> to vector<8x128xbf16>
    %cst_17 = arith.constant dense<0.000000e+00> : vector<8x128xf32>
    %43 = tpu.matmul %42, %41, %cst_17 {dimension_numbers = #tpu.dot_dimension_numbers<[1], [0], [0], [1], [0, 0, 1, 1], [], []>} : vector<8x128xbf16>, vector<128x128xbf16>, vector<8x128xf32> -> vector<8x128xf32>
    %44 = vector.extract_strided_slice %4 {offsets = [4, 0], sizes = [1, 128], strides = [1, 1]} : vector<8x128xf32> to vector<1x128xf32>
    %45 = vector.broadcast %44 : vector<1x128xf32> to vector<8x128xf32>
    %46 = arith.addf %43, %45 : vector<8x128xf32>
    %47 = math.tanh %46 : vector<8x128xf32>
    %cst_18 = arith.constant 2.000000e+00 : f32
    %48 = vector.broadcast %cst_18 : f32 to vector<8x128xf32>
    %49 = arith.mulf %47, %48 : vector<8x128xf32>
    %c0_19 = arith.constant 0 : index
    %c0_20 = arith.constant 0 : index
    %50 = vector.load %arg5[%c0_19, %c0_20] : memref<8x128xf32, #tpu.memory_space<vmem>>, vector<8x128xf32>
    tpu.vector_store %arg5[%c0_19, %c0_20], %49 {strides = array<i32>} : memref<8x128xf32, #tpu.memory_space<vmem>>, vector<8x128xf32>,
    return
  }
  func.func @transform_0(%arg0: i32) -> (i32, i32) {
    %c0_i32 = arith.constant 0 : i32
    %c0_i32_0 = arith.constant 0 : i32
    return %arg0, %c0_i32 : i32, i32
  }
  func.func @transform_1(%arg0: i32) -> (i32, i32) {
    %c0_i32 = arith.constant 0 : i32
    %c0_i32_0 = arith.constant 0 : i32
    %c0_i32_1 = arith.constant 0 : i32
    return %c0_i32, %c0_i32_0 : i32, i32
  }
  func.func @transform_2(%arg0: i32) -> (i32, i32) {
    %c0_i32 = arith.constant 0 : i32
    %c0_i32_0 = arith.constant 0 : i32
    %c0_i32_1 = arith.constant 0 : i32
    return %c0_i32, %c0_i32_0 : i32, i32
  }
  func.func @transform_3(%arg0: i32) -> (i32, i32) {
    %c0_i32 = arith.constant 0 : i32
    %c0_i32_0 = arith.constant 0 : i32
    %c0_i32_1 = arith.constant 0 : i32
    return %c0_i32, %c0_i32_0 : i32, i32
  }
  func.func @transform_4(%arg0: i32) -> (i32, i32) {
    %c0_i32 = arith.constant 0 : i32
    %c0_i32_0 = arith.constant 0 : i32
    return %arg0, %c0_i32 : i32, i32
  }
}

</mosaic_0001>

<llo_original>
// kernel: tpu_custom_call.1
$region0: #{tpu_custom_call.1}
  #allocation0 [shape = 'u32[]', space=smem, size = 0x4, offset = 0x4, fixed_abs, tag = 'smem constant byte address 0x4 - core index']
  #allocation1 [shape = 'u32[144,128]{1,0:T(1,128)}', space=vmem, size = 0x12000, scoped, tag = 'internal scratch']
  %s0 = inlined_call_operand.hbm [shape: f32[8,16], index: 0, kind: input, shape index: {}]
  %s1 = inlined_call_operand.hbm [shape: bf16[16,512], index: 1, kind: input, shape index: {}]
  %s2 = inlined_call_operand.hbm [shape: bf16[512,128], index: 2, kind: input, shape index: {}]
  %s3 = inlined_call_operand.hbm [shape: f32[8,128], index: 3, kind: input, shape index: {}]
  %s4 = inlined_call_operand.hbm [shape: f32[8,128], index: 4, kind: output, shape index: {}]
  %s5 = sld [smem:[#allocation0]]
  $region42: #{tpu_custom_call.1} parent=0
    _
  %s7 = ssub.s32 1, %s5
  %s8 = scalar_select 0, %s7, %s5
  $region1: #{tpu_custom_call.1} parent=0
    #allocation2 [shape = 'u8[4096]{0}', space=vmem, size = 0x1000, scoped, tag = 'input window, operand 0, single buffered']
    #allocation3 [shape = 's32[1]{0}', space=sflag, size = 0x4, scoped, tag = 'scoped memory for tpu_custom_call.1']
    #allocation4 [shape = 's32[1]{0}', space=sflag, size = 0x4, scoped, tag = 'scoped memory for tpu_custom_call.1']
    #allocation5 [shape = 'u8[16384]{0}', space=vmem, size = 0x4000, scoped, tag = 'input window, operand 1, single buffered']
    #allocation6 [shape = 's32[1]{0}', space=sflag, size = 0x4, scoped, tag = 'scoped memory for tpu_custom_call.1']
    #allocation7 [shape = 'u8[131072]{0}', space=vmem, size = 0x20000, scoped, tag = 'input window, operand 2, single buffered']
    #allocation8 [shape = 'u8[4096]{0}', space=vmem, size = 0x1000, scoped, tag = 'input window, operand 3, single buffered']
    #allocation9 [shape = 's32[1]{0}', space=sflag, size = 0x4, scoped, tag = 'scoped memory for tpu_custom_call.1']
    #allocation10 [shape = 'u8[4096]{0}', space=vmem, size = 0x1000, scoped, tag = 'output window, operand 0, single buffered']
    %9 = vsyncpa [#allocation3], 0
    %10 = vsyncpa [#allocation6], 0
    %11 = vsyncpa [#allocation9], 0
    %12 = vsyncpa [#allocation4], 0
    // Predicated region
    $region2: #{tpu_custom_call.1} parent=1 // pred_check
      _
    $region3: #{tpu_custom_call.1} parent=1 // pred_check_branch
      %14 = sbr.rel (0) target = $region5
    $region4: #{tpu_custom_call.1} parent=1 // pred_region
      %s16 = ssub.s32 128, 128
      %17 = vsyncadd [#allocation3], %s16
      %s19 = sshll.u32 [#allocation2], 4
      %s20 = int_to_ptr.vmem [resolvable:$true] %s19
      %22 = dma.hbm_to_vmem [thread:$0]  %s0, 128, %s20, [#allocation3]
    $region5: #{tpu_custom_call.1} parent=1 // pred_fallthru
      _
    // Predicated region
    $region6: #{tpu_custom_call.1} parent=1 // pred_check
      _
    $region7: #{tpu_custom_call.1} parent=1 // pred_check_branch
      %24 = sbr.rel (0) target = $region9
    $region8: #{tpu_custom_call.1} parent=1 // pred_region
      %s26 = ssub.s32 512, 512
      %27 = vsyncadd [#allocation6], %s26
      %s28 = sshll.u32 [#allocation5], 4
      %s29 = int_to_ptr.vmem [resolvable:$true] %s28
      %34 = dma.hbm_to_vmem [thread:$0]  %s1, 512, %s29, [#allocation6], 256, 256, 16
    $region9: #{tpu_custom_call.1} parent=1 // pred_fallthru
      _
    // Predicated region
    $region10: #{tpu_custom_call.1} parent=1 // pred_check
      _
    $region11: #{tpu_custom_call.1} parent=1 // pred_check_branch
      %36 = sbr.rel (0) target = $region13
    $region12: #{tpu_custom_call.1} parent=1 // pred_region
      %s38 = ssub.s32 4096, 4096
      %39 = vsyncadd [#allocation6], %s38
      %s40 = sshll.u32 [#allocation7], 4
      %s41 = int_to_ptr.vmem [resolvable:$true] %s40
      %46 = dma.hbm_to_vmem [thread:$0]  %s2, 4096, %s41, [#allocation6], 64, 64, 4
    $region13: #{tpu_custom_call.1} parent=1 // pred_fallthru
      _
    // Predicated region
    $region14: #{tpu_custom_call.1} parent=1 // pred_check
      _
    $region15: #{tpu_custom_call.1} parent=1 // pred_check_branch
      %48 = sbr.rel (0) target = $region17
    $region16: #{tpu_custom_call.1} parent=1 // pred_region
      %s50 = ssub.s32 128, 128
      %51 = vsyncadd [#allocation9], %s50
      %s53 = sshll.u32 [#allocation8], 4
      %s54 = int_to_ptr.vmem [resolvable:$true] %s53
      %56 = dma.hbm_to_vmem [thread:$0]  %s3, 128, %s54, [#allocation9]
    $region17: #{tpu_custom_call.1} parent=1 // pred_fallthru
      _
    // Predicated region
    $region18: #{tpu_custom_call.1} parent=1 // pred_check
      _
    $region19: #{tpu_custom_call.1} parent=1 // pred_check_branch
      %58 = sbr.rel (0) target = $region21
    $region20: #{tpu_custom_call.1} parent=1 // pred_region
      %59 = dma.done [#allocation3], 128
    $region21: #{tpu_custom_call.1} parent=1 // pred_fallthru
      _
    // Predicated region
    $region22: #{tpu_custom_call.1} parent=1 // pred_check
      _
    $region23: #{tpu_custom_call.1} parent=1 // pred_check_branch
      %61 = sbr.rel (0) target = $region25
    $region24: #{tpu_custom_call.1} parent=1 // pred_region
      %62 = dma.done [#allocation6], 512
    $region25: #{tpu_custom_call.1} parent=1 // pred_fallthru
      _
    // Predicated region
    $region26: #{tpu_custom_call.1} parent=1 // pred_check
      _
    $region27: #{tpu_custom_call.1} parent=1 // pred_check_branch
      %64 = sbr.rel (0) target = $region29
    $region28: #{tpu_custom_call.1} parent=1 // pred_region
      %65 = dma.done [#allocation6], 4096
    $region29: #{tpu_custom_call.1} parent=1 // pred_fallthru
      _
    // Predicated region
    $region30: #{tpu_custom_call.1} parent=1 // pred_check
      _
    $region31: #{tpu_custom_call.1} parent=1 // pred_check_branch
      %67 = sbr.rel (0) target = $region33
    $region32: #{tpu_custom_call.1} parent=1 // pred_region
      %68 = dma.done [#allocation9], 128
    $region33: #{tpu_custom_call.1} parent=1 // pred_fallthru
      _
    %v70 = vld [vmem:[#allocation2] sm:$0xff]
    %v71 = vpack.c.bf16 %v70, %v70
    %v72 = vld [vmem:[#allocation5] sm:$0xff]
    %v73 = vld [vmem:[#allocation5 + $0x8] sm:$0xff]
    %v74 = vld [vmem:[#allocation5 + $0x10] sm:$0xff]
    %v75 = vld [vmem:[#allocation5 + $0x18] sm:$0xff]
    %v80 = vunpack.c.l.b16 %v72
    %v81 = vunpack.c.h.b16 %v72
    %v82 = vunpack.c.l.b16 %v73
    %v83 = vunpack.c.h.b16 %v73
    %v84 = vunpack.c.l.b16 %v74
    %v85 = vunpack.c.h.b16 %v74
    %v86 = vunpack.c.l.b16 %v75
    %v87 = vunpack.c.h.b16 %v75
    %v88 = vpack.c.b16 %v84, %v80
    %v89 = vpack.c.b16 %v85, %v81
    %v90 = vpack.c.b16 %v86, %v82
    %v91 = vpack.c.b16 %v87, %v83
    %vm96 = vcmask 130048
    %v98 = vsel %vm96, %v71, 0
    %100 = vmatprep.subr.bf16.mxu0 0
    %101 = vmatpush1.bf16.msra.mxu0 0
    %102 = vmatprep.subr.bf16.mxu0 0
    %103 = vmatpush1.bf16.msra.mxu0 0
    %104 = vmatprep.subr.bf16.mxu0 0
    %105 = vmatpush1.bf16.msra.mxu0 0
    %106 = vmatprep.subr.bf16.mxu0 0
    %107 = vmatpush1.bf16.msra.mxu0 0
    %108 = vmatprep.subr.bf16.mxu0 0
    %109 = vmatpush1.bf16.msra.mxu0 0
    %110 = vmatprep.subr.bf16.mxu0 0
    %111 = vmatpush1.bf16.msra.mxu0 0
    %112 = vmatprep.subr.bf16.mxu0 0
    %113 = vmatpush1.bf16.msra.mxu0 0
    %114 = vmatprep.subr.bf16.mxu0 %v89
    %115 = vmatpush1.bf16.msra.mxu0 %v88
    %116 = vmatprep.subr.bf16.mxu0 0
    %117 = vmatpush2.bf16.msra.mxu0 0
    %118 = vmatprep.subr.bf16.mxu0 0
    %119 = vmatpush2.bf16.msra.mxu0 0
    %120 = vmatprep.subr.bf16.mxu0 0
    %121 = vmatpush2.bf16.msra.mxu0 0
    %122 = vmatprep.subr.bf16.mxu0 0
    %123 = vmatpush2.bf16.msra.mxu0 0
    %124 = vmatprep.subr.bf16.mxu0 0
    %125 = vmatpush2.bf16.msra.mxu0 0
    %126 = vmatprep.subr.bf16.mxu0 0
    %127 = vmatpush2.bf16.msra.mxu0 0
    %128 = vmatprep.subr.bf16.mxu0 0
    %129 = vmatpush2.bf16.msra.mxu0 0
    %130 = vmatprep.subr.bf16.mxu0 0
    %131 = vmatpush2.bf16.msra.mxu0 0
    %132 = vmatprep.mubr.bf16.mxu0 0
    %133 = vmatmul.mubr.bf16.gmra.mxu0 %v98
    %v134 = vpop.f32.mrf.mxu0
    %v135 = vadd.f32 0.0, %v134
    %v136 = vpop.f32.mrf.mxu0
    %v137 = vadd.f32 0.0, %v136
    %v138 = vpop.f32.mrf.mxu0
    %v139 = vpop.f32.mrf.mxu0
    %140 = vdwg.mxu0
    %141 = vmatprep.subr.bf16.mxu0 0
    %142 = vmatpush1.bf16.msra.mxu0 0
    %143 = vmatprep.subr.bf16.mxu0 0
    %144 = vmatpush1.bf16.msra.mxu0 0
    %145 = vmatprep.subr.bf16.mxu0 0
    %146 = vmatpush1.bf16.msra.mxu0 0
    %147 = vmatprep.subr.bf16.mxu0 0
    %148 = vmatpush1.bf16.msra.mxu0 0
    %149 = vmatprep.subr.bf16.mxu0 0
    %150 = vmatpush1.bf16.msra.mxu0 0
    %151 = vmatprep.subr.bf16.mxu0 0
    %152 = vmatpush1.bf16.msra.mxu0 0
    %153 = vmatprep.subr.bf16.mxu0 0
    %154 = vmatpush1.bf16.msra.mxu0 0
    %155 = vmatprep.subr.bf16.mxu0 %v91
    %156 = vmatpush1.bf16.msra.mxu0 %v90
    %157 = vmatprep.subr.bf16.mxu0 0
    %158 = vmatpush2.bf16.msra.mxu0 0
    %159 = vmatprep.subr.bf16.mxu0 0
    %160 = vmatpush2.bf16.msra.mxu0 0
    %161 = vmatprep.subr.bf16.mxu0 0
    %162 = vmatpush2.bf16.msra.mxu0 0
    %163 = vmatprep.subr.bf16.mxu0 0
    %164 = vmatpush2.bf16.msra.mxu0 0
    %165 = vmatprep.subr.bf16.mxu0 0
    %166 = vmatpush2.bf16.msra.mxu0 0
    %167 = vmatprep.subr.bf16.mxu0 0
    %168 = vmatpush2.bf16.msra.mxu0 0
    %169 = vmatprep.subr.bf16.mxu0 0
    %170 = vmatpush2.bf16.msra.mxu0 0
    %171 = vmatprep.subr.bf16.mxu0 0
    %172 = vmatpush2.bf16.msra.mxu0 0
    %173 = vmatprep.mubr.bf16.mxu0 0
    %174 = vmatmul.mubr.bf16.gmra.mxu0 %v98
    %v175 = vpop.f32.mrf.mxu0
    %v176 = vadd.f32 0.0, %v175
    %v177 = vpop.f32.mrf.mxu0
    %v178 = vadd.f32 0.0, %v177
    %v179 = vpop.f32.mrf.mxu0
    %v180 = vpop.f32.mrf.mxu0
    %181 = vdwg.mxu0
    %v182 = vld [vmem:[#allocation8] sm:$0xff]
    %v183 = vlaneseq
    %v184 = vshrl.u32 %v183, 7
    %v185 = vsub.s32 0, %v184
    %v186 = vrot.slane %v182, %v185
    %v187 = vadd.f32 %v135, %v186
    %v188 = vmax.f32 %v187, 0.0
    %v189 = vld [vmem:[#allocation7] sm:$0xf]
    %v190 = vld [vmem:[#allocation7 + $0x4] sm:$0xf]
    %v191 = vld [vmem:[#allocation7 + $0x8] sm:$0xf]
    %v192 = vld [vmem:[#allocation7 + $0xc] sm:$0xf]
    %v193 = vld [vmem:[#allocation7 + $0x10] sm:$0xf]
    %v194 = vld [vmem:[#allocation7 + $0x14] sm:$0xf]
    %v195 = vld [vmem:[#allocation7 + $0x18] sm:$0xf]
    %v196 = vld [vmem:[#allocation7 + $0x1c] sm:$0xf]
    %v197 = vld [vmem:[#allocation7 + $0x20] sm:$0xf]
    %v198 = vld [vmem:[#allocation7 + $0x24] sm:$0xf]
    %v199 = vld [vmem:[#allocation7 + $0x28] sm:$0xf]
    %v200 = vld [vmem:[#allocation7 + $0x2c] sm:$0xf]
    %v201 = vld [vmem:[#allocation7 + $0x30] sm:$0xf]
    %v202 = vld [vmem:[#allocation7 + $0x34] sm:$0xf]
    %v203 = vld [vmem:[#allocation7 + $0x38] sm:$0xf]
    %v204 = vld [vmem:[#allocation7 + $0x3c] sm:$0xf]
    %v205 = vpack.c.bf16 %v188, %v188
    %v222 = vunpack.c.l.b16 %v189
    %v223 = vunpack.c.l.b16 %v190
    %v224 = vunpack.c.l.b16 %v191
    %v225 = vunpack.c.l.b16 %v192
    %v226 = vunpack.c.l.b16 %v193
    %v227 = vunpack.c.l.b16 %v194
    %v228 = vunpack.c.l.b16 %v195
    %v229 = vunpack.c.l.b16 %v196
    %v230 = vunpack.c.l.b16 %v197
    %v231 = vunpack.c.l.b16 %v198
    %v232 = vunpack.c.l.b16 %v199
    %v233 = vunpack.c.l.b16 %v200
    %v234 = vunpack.c.l.b16 %v201
    %v235 = vunpack.c.l.b16 %v202
    %v236 = vunpack.c.l.b16 %v203
    %v237 = vunpack.c.l.b16 %v204
    %v238 = vpack.c.b16 %v223, %v222
    %v239 = vpack.c.b16 %v225, %v224
    %v240 = vpack.c.b16 %v227, %v226
    %v241 = vpack.c.b16 %v229, %v228
    %v242 = vpack.c.b16 %v231, %v230
    %v243 = vpack.c.b16 %v233, %v232
    %v244 = vpack.c.b16 %v235, %v234
    %v245 = vpack.c.b16 %v237, %v236
    %254 = vmatprep.subr.bf16.mxu0 0
    %255 = vmatpush1.bf16.msra.mxu0 %v245
    %256 = vmatprep.subr.bf16.mxu0 0
    %257 = vmatpush1.bf16.msra.mxu0 %v244
    %258 = vmatprep.subr.bf16.mxu0 0
    %259 = vmatpush1.bf16.msra.mxu0 %v243
    %260 = vmatprep.subr.bf16.mxu0 0
    %261 = vmatpush1.bf16.msra.mxu0 %v242
    %262 = vmatprep.subr.bf16.mxu0 0
    %263 = vmatpush1.bf16.msra.mxu0 %v241
    %264 = vmatprep.subr.bf16.mxu0 0
    %265 = vmatpush1.bf16.msra.mxu0 %v240
    %266 = vmatprep.subr.bf16.mxu0 0
    %267 = vmatpush1.bf16.msra.mxu0 %v239
    %268 = vmatprep.subr.bf16.mxu0 0
    %269 = vmatpush1.bf16.msra.mxu0 %v238
    %270 = vmatprep.subr.bf16.mxu0 0
    %271 = vmatpush2.bf16.msra.mxu0 0
    %272 = vmatprep.subr.bf16.mxu0 0
    %273 = vmatpush2.bf16.msra.mxu0 0
    %274 = vmatprep.subr.bf16.mxu0 0
    %275 = vmatpush2.bf16.msra.mxu0 0
    %276 = vmatprep.subr.bf16.mxu0 0
    %277 = vmatpush2.bf16.msra.mxu0 0
    %278 = vmatprep.subr.bf16.mxu0 0
    %279 = vmatpush2.bf16.msra.mxu0 0
    %280 = vmatprep.subr.bf16.mxu0 0
    %281 = vmatpush2.bf16.msra.mxu0 0
    %282 = vmatprep.subr.bf16.mxu0 0
    %283 = vmatpush2.bf16.msra.mxu0 0
    %284 = vmatprep.subr.bf16.mxu0 0
    %285 = vmatpush2.bf16.msra.mxu0 0
    %286 = vmatprep.mubr.bf16.mxu0 0
    %287 = vmatmul.mubr.bf16.gmra.mxu0 %v205
    %v288 = vpop.f32.mrf.mxu0
    %v289 = vadd.f32 %v137, %v288
    %v290 = vpop.f32.mrf.mxu0
    %v291 = vpop.f32.mrf.mxu0
    %v292 = vpop.f32.mrf.mxu0
    %293 = vdwg.mxu0
    %v294 = vlaneseq
    %v295 = vshrl.u32 %v294, 7
    %v296 = vsub.s32 1, %v295
    %v297 = vrot.slane %v182, %v296
    %v298 = vadd.f32 %v289, %v297
    %v299 = vmax.f32 %v298, 0.0
    %v300 = vld [vmem:[#allocation7 + $0x40] sm:$0xf]
    %v301 = vld [vmem:[#allocation7 + $0x44] sm:$0xf]
    %v302 = vld [vmem:[#allocation7 + $0x48] sm:$0xf]
    %v303 = vld [vmem:[#allocation7 + $0x4c] sm:$0xf]
    %v304 = vld [vmem:[#allocation7 + $0x50] sm:$0xf]
    %v305 = vld [vmem:[#allocation7 + $0x54] sm:$0xf]
    %v306 = vld [vmem:[#allocation7 + $0x58] sm:$0xf]
    %v307 = vld [vmem:[#allocation7 + $0x5c] sm:$0xf]
    %v308 = vld [vmem:[#allocation7 + $0x60] sm:$0xf]
    %v309 = vld [vmem:[#allocation7 + $0x64] sm:$0xf]
    %v310 = vld [vmem:[#allocation7 + $0x68] sm:$0xf]
    %v311 = vld [vmem:[#allocation7 + $0x6c] sm:$0xf]
    %v312 = vld [vmem:[#allocation7 + $0x70] sm:$0xf]
    %v313 = vld [vmem:[#allocation7 + $0x74] sm:$0xf]
    %v314 = vld [vmem:[#allocation7 + $0x78] sm:$0xf]
    %v315 = vld [vmem:[#allocation7 + $0x7c] sm:$0xf]
    %v316 = vpack.c.bf16 %v299, %v299
    %v333 = vunpack.c.l.b16 %v300
    %v334 = vunpack.c.l.b16 %v301
    %v335 = vunpack.c.l.b16 %v302
    %v336 = vunpack.c.l.b16 %v303
    %v337 = vunpack.c.l.b16 %v304
    %v338 = vunpack.c.l.b16 %v305
    %v339 = vunpack.c.l.b16 %v306
    %v340 = vunpack.c.l.b16 %v307
    %v341 = vunpack.c.l.b16 %v308
    %v342 = vunpack.c.l.b16 %v309
    %v343 = vunpack.c.l.b16 %v310
    %v344 = vunpack.c.l.b16 %v311
    %v345 = vunpack.c.l.b16 %v312
    %v346 = vunpack.c.l.b16 %v313
    %v347 = vunpack.c.l.b16 %v314
    %v348 = vunpack.c.l.b16 %v315
    %v349 = vpack.c.b16 %v334, %v333
    %v350 = vpack.c.b16 %v336, %v335
    %v351 = vpack.c.b16 %v338, %v337
    %v352 = vpack.c.b16 %v340, %v339
    %v353 = vpack.c.b16 %v342, %v341
    %v354 = vpack.c.b16 %v344, %v343
    %v355 = vpack.c.b16 %v346, %v345
    %v356 = vpack.c.b16 %v348, %v347
    %365 = vmatprep.subr.bf16.mxu0 0
    %366 = vmatpush1.bf16.msra.mxu0 %v356
    %367 = vmatprep.subr.bf16.mxu0 0
    %368 = vmatpush1.bf16.msra.mxu0 %v355
    %369 = vmatprep.subr.bf16.mxu0 0
    %370 = vmatpush1.bf16.msra.mxu0 %v354
    %371 = vmatprep.subr.bf16.mxu0 0
    %372 = vmatpush1.bf16.msra.mxu0 %v353
    %373 = vmatprep.subr.bf16.mxu0 0
    %374 = vmatpush1.bf16.msra.mxu0 %v352
    %375 = vmatprep.subr.bf16.mxu0 0
    %376 = vmatpush1.bf16.msra.mxu0 %v351
    %377 = vmatprep.subr.bf16.mxu0 0
    %378 = vmatpush1.bf16.msra.mxu0 %v350
    %379 = vmatprep.subr.bf16.mxu0 0
    %380 = vmatpush1.bf16.msra.mxu0 %v349
    %381 = vmatprep.subr.bf16.mxu0 0
    %382 = vmatpush2.bf16.msra.mxu0 0
    %383 = vmatprep.subr.bf16.mxu0 0
    %384 = vmatpush2.bf16.msra.mxu0 0
    %385 = vmatprep.subr.bf16.mxu0 0
    %386 = vmatpush2.bf16.msra.mxu0 0
    %387 = vmatprep.subr.bf16.mxu0 0
    %388 = vmatpush2.bf16.msra.mxu0 0
    %389 = vmatprep.subr.bf16.mxu0 0
    %390 = vmatpush2.bf16.msra.mxu0 0
    %391 = vmatprep.subr.bf16.mxu0 0
    %392 = vmatpush2.bf16.msra.mxu0 0
    %393 = vmatprep.subr.bf16.mxu0 0
    %394 = vmatpush2.bf16.msra.mxu0 0
    %395 = vmatprep.subr.bf16.mxu0 0
    %396 = vmatpush2.bf16.msra.mxu0 0
    %397 = vmatprep.mubr.bf16.mxu0 0
    %398 = vmatmul.mubr.bf16.gmra.mxu0 %v316
    %v399 = vpop.f32.mrf.mxu0
    %v400 = vadd.f32 %v176, %v399
    %v401 = vpop.f32.mrf.mxu0
    %v402 = vpop.f32.mrf.mxu0
    %v403 = vpop.f32.mrf.mxu0
    %404 = vdwg.mxu0
    %v405 = vlaneseq
    %v406 = vshrl.u32 %v405, 7
    %v407 = vsub.s32 2, %v406
    %v408 = vrot.slane %v182, %v407
    %v409 = vadd.f32 %v400, %v408
    %v410 = vmax.f32 %v409, 0.0
    %v411 = vld [vmem:[#allocation7 + $0x80] sm:$0xf]
    %v412 = vld [vmem:[#allocation7 + $0x84] sm:$0xf]
    %v413 = vld [vmem:[#allocation7 + $0x88] sm:$0xf]
    %v414 = vld [vmem:[#allocation7 + $0x8c] sm:$0xf]
    %v415 = vld [vmem:[#allocation7 + $0x90] sm:$0xf]
    %v416 = vld [vmem:[#allocation7 + $0x94] sm:$0xf]
    %v417 = vld [vmem:[#allocation7 + $0x98] sm:$0xf]
    %v418 = vld [vmem:[#allocation7 + $0x9c] sm:$0xf]
    %v419 = vld [vmem:[#allocation7 + $0xa0] sm:$0xf]
    %v420 = vld [vmem:[#allocation7 + $0xa4] sm:$0xf]
    %v421 = vld [vmem:[#allocation7 + $0xa8] sm:$0xf]
    %v422 = vld [vmem:[#allocation7 + $0xac] sm:$0xf]
    %v423 = vld [vmem:[#allocation7 + $0xb0] sm:$0xf]
    %v424 = vld [vmem:[#allocation7 + $0xb4] sm:$0xf]
    %v425 = vld [vmem:[#allocation7 + $0xb8] sm:$0xf]
    %v426 = vld [vmem:[#allocation7 + $0xbc] sm:$0xf]
    %v427 = vpack.c.bf16 %v410, %v410
    %v444 = vunpack.c.l.b16 %v411
    %v445 = vunpack.c.l.b16 %v412
    %v446 = vunpack.c.l.b16 %v413
    %v447 = vunpack.c.l.b16 %v414
    %v448 = vunpack.c.l.b16 %v415
    %v449 = vunpack.c.l.b16 %v416
    %v450 = vunpack.c.l.b16 %v417
    %v451 = vunpack.c.l.b16 %v418
    %v452 = vunpack.c.l.b16 %v419
    %v453 = vunpack.c.l.b16 %v420
    %v454 = vunpack.c.l.b16 %v421
    %v455 = vunpack.c.l.b16 %v422
    %v456 = vunpack.c.l.b16 %v423
    %v457 = vunpack.c.l.b16 %v424
    %v458 = vunpack.c.l.b16 %v425
    %v459 = vunpack.c.l.b16 %v426
    %v460 = vpack.c.b16 %v445, %v444
    %v461 = vpack.c.b16 %v447, %v446
    %v462 = vpack.c.b16 %v449, %v448
    %v463 = vpack.c.b16 %v451, %v450
    %v464 = vpack.c.b16 %v453, %v452
    %v465 = vpack.c.b16 %v455, %v454
    %v466 = vpack.c.b16 %v457, %v456
    %v467 = vpack.c.b16 %v459, %v458
    %476 = vmatprep.subr.bf16.mxu0 0
    %477 = vmatpush1.bf16.msra.mxu0 %v467
    %478 = vmatprep.subr.bf16.mxu0 0
    %479 = vmatpush1.bf16.msra.mxu0 %v466
    %480 = vmatprep.subr.bf16.mxu0 0
    %481 = vmatpush1.bf16.msra.mxu0 %v465
    %482 = vmatprep.subr.bf16.mxu0 0
    %483 = vmatpush1.bf16.msra.mxu0 %v464
    %484 = vmatprep.subr.bf16.mxu0 0
    %485 = vmatpush1.bf16.msra.mxu0 %v463
    %486 = vmatprep.subr.bf16.mxu0 0
    %487 = vmatpush1.bf16.msra.mxu0 %v462
    %488 = vmatprep.subr.bf16.mxu0 0
    %489 = vmatpush1.bf16.msra.mxu0 %v461
    %490 = vmatprep.subr.bf16.mxu0 0
    %491 = vmatpush1.bf16.msra.mxu0 %v460
    %492 = vmatprep.subr.bf16.mxu0 0
    %493 = vmatpush2.bf16.msra.mxu0 0
    %494 = vmatprep.subr.bf16.mxu0 0
    %495 = vmatpush2.bf16.msra.mxu0 0
    %496 = vmatprep.subr.bf16.mxu0 0
    %497 = vmatpush2.bf16.msra.mxu0 0
    %498 = vmatprep.subr.bf16.mxu0 0
    %499 = vmatpush2.bf16.msra.mxu0 0
    %500 = vmatprep.subr.bf16.mxu0 0
    %501 = vmatpush2.bf16.msra.mxu0 0
    %502 = vmatprep.subr.bf16.mxu0 0
    %503 = vmatpush2.bf16.msra.mxu0 0
    %504 = vmatprep.subr.bf16.mxu0 0
    %505 = vmatpush2.bf16.msra.mxu0 0
    %506 = vmatprep.subr.bf16.mxu0 0
    %507 = vmatpush2.bf16.msra.mxu0 0
    %508 = vmatprep.mubr.bf16.mxu0 0
    %509 = vmatmul.mubr.bf16.gmra.mxu0 %v427
    %v510 = vpop.f32.mrf.mxu0
    %v511 = vadd.f32 %v178, %v510
    %v512 = vpop.f32.mrf.mxu0
    %v513 = vpop.f32.mrf.mxu0
    %v514 = vpop.f32.mrf.mxu0
    %515 = vdwg.mxu0
    %v516 = vlaneseq
    %v517 = vshrl.u32 %v516, 7
    %v518 = vsub.s32 3, %v517
    %v519 = vrot.slane %v182, %v518
    %v520 = vadd.f32 %v511, %v519
    %v521 = vmax.f32 %v520, 0.0
    %v522 = vld [vmem:[#allocation7 + $0xc0] sm:$0xf]
    %v523 = vld [vmem:[#allocation7 + $0xc4] sm:$0xf]
    %v524 = vld [vmem:[#allocation7 + $0xc8] sm:$0xf]
    %v525 = vld [vmem:[#allocation7 + $0xcc] sm:$0xf]
    %v526 = vld [vmem:[#allocation7 + $0xd0] sm:$0xf]
    %v527 = vld [vmem:[#allocation7 + $0xd4] sm:$0xf]
    %v528 = vld [vmem:[#allocation7 + $0xd8] sm:$0xf]
    %v529 = vld [vmem:[#allocation7 + $0xdc] sm:$0xf]
    %v530 = vld [vmem:[#allocation7 + $0xe0] sm:$0xf]
    %v531 = vld [vmem:[#allocation7 + $0xe4] sm:$0xf]
    %v532 = vld [vmem:[#allocation7 + $0xe8] sm:$0xf]
    %v533 = vld [vmem:[#allocation7 + $0xec] sm:$0xf]
    %v534 = vld [vmem:[#allocation7 + $0xf0] sm:$0xf]
    %v535 = vld [vmem:[#allocation7 + $0xf4] sm:$0xf]
    %v536 = vld [vmem:[#allocation7 + $0xf8] sm:$0xf]
    %v537 = vld [vmem:[#allocation7 + $0xfc] sm:$0xf]
    %v538 = vpack.c.bf16 %v521, %v521
    %v539 = vlaneseq
    %v540 = vshrl.u32 %v539, 7
    %v541 = vsub.s32 4, %v540
    %v542 = vrot.slane %v182, %v541
    %v559 = vunpack.c.l.b16 %v522
    %v560 = vunpack.c.l.b16 %v523
    %v561 = vunpack.c.l.b16 %v524
    %v562 = vunpack.c.l.b16 %v525
    %v563 = vunpack.c.l.b16 %v526
    %v564 = vunpack.c.l.b16 %v527
    %v565 = vunpack.c.l.b16 %v528
    %v566 = vunpack.c.l.b16 %v529
    %v567 = vunpack.c.l.b16 %v530
    %v568 = vunpack.c.l.b16 %v531
    %v569 = vunpack.c.l.b16 %v532
    %v570 = vunpack.c.l.b16 %v533
    %v571 = vunpack.c.l.b16 %v534
    %v572 = vunpack.c.l.b16 %v535
    %v573 = vunpack.c.l.b16 %v536
    %v574 = vunpack.c.l.b16 %v537
    %v575 = vpack.c.b16 %v560, %v559
    %v576 = vpack.c.b16 %v562, %v561
    %v577 = vpack.c.b16 %v564, %v563
    %v578 = vpack.c.b16 %v566, %v565
    %v579 = vpack.c.b16 %v568, %v567
    %v580 = vpack.c.b16 %v570, %v569
    %v581 = vpack.c.b16 %v572, %v571
    %v582 = vpack.c.b16 %v574, %v573
    %591 = vmatprep.subr.bf16.mxu0 0
    %592 = vmatpush1.bf16.msra.mxu0 %v582
    %593 = vmatprep.subr.bf16.mxu0 0
    %594 = vmatpush1.bf16.msra.mxu0 %v581
    %595 = vmatprep.subr.bf16.mxu0 0
    %596 = vmatpush1.bf16.msra.mxu0 %v580
    %597 = vmatprep.subr.bf16.mxu0 0
    %598 = vmatpush1.bf16.msra.mxu0 %v579
    %599 = vmatprep.subr.bf16.mxu0 0
    %600 = vmatpush1.bf16.msra.mxu0 %v578
    %601 = vmatprep.subr.bf16.mxu0 0
    %602 = vmatpush1.bf16.msra.mxu0 %v577
    %603 = vmatprep.subr.bf16.mxu0 0
    %604 = vmatpush1.bf16.msra.mxu0 %v576
    %605 = vmatprep.subr.bf16.mxu0 0
    %606 = vmatpush1.bf16.msra.mxu0 %v575
    %607 = vmatprep.subr.bf16.mxu0 0
    %608 = vmatpush2.bf16.msra.mxu0 0
    %609 = vmatprep.subr.bf16.mxu0 0
    %610 = vmatpush2.bf16.msra.mxu0 0
    %611 = vmatprep.subr.bf16.mxu0 0
    %612 = vmatpush2.bf16.msra.mxu0 0
    %613 = vmatprep.subr.bf16.mxu0 0
    %614 = vmatpush2.bf16.msra.mxu0 0
    %615 = vmatprep.subr.bf16.mxu0 0
    %616 = vmatpush2.bf16.msra.mxu0 0
    %617 = vmatprep.subr.bf16.mxu0 0
    %618 = vmatpush2.bf16.msra.mxu0 0
    %619 = vmatprep.subr.bf16.mxu0 0
    %620 = vmatpush2.bf16.msra.mxu0 0
    %621 = vmatprep.subr.bf16.mxu0 0
    %622 = vmatpush2.bf16.msra.mxu0 0
    %623 = vmatprep.mubr.bf16.mxu0 0
    %624 = vmatmul.mubr.bf16.gmra.mxu0 %v538
    %v625 = vpop.f32.mrf.mxu0
    %v626 = vadd.f32 %v542, %v625
    %v627 = vpop.f32.mrf.mxu0
    %v628 = vpop.f32.mrf.mxu0
    %v629 = vpop.f32.mrf.mxu0
    %630 = vdwg.mxu0
    %v631 = vtanh.pop %v626
    %v632 = vmul.f32 %v631, 2.0
    %633 = vst [vmem:[#allocation10] sm:$0xff] %v632
    // Predicated region
    $region34: #{tpu_custom_call.1} parent=1 // pred_check
      _
    $region35: #{tpu_custom_call.1} parent=1 // pred_check_branch
      %635 = sbr.rel (0) target = $region37
    $region36: #{tpu_custom_call.1} parent=1 // pred_region
      %s637 = ssub.s32 128, 128
      %638 = vsyncadd [#allocation4], %s637
      %s640 = sshll.u32 [#allocation10], 4
      %s641 = int_to_ptr.vmem [resolvable:$true] %s640
      %643 = dma.vmem_to_hbm [thread:$0]  %s641, 128, %s4, [#allocation4]
    $region37: #{tpu_custom_call.1} parent=1 // pred_fallthru
      _
    // Predicated region
    $region38: #{tpu_custom_call.1} parent=1 // pred_check
      _
    $region39: #{tpu_custom_call.1} parent=1 // pred_check_branch
      %645 = sbr.rel (0) target = $region41
    $region40: #{tpu_custom_call.1} parent=1 // pred_region
      %646 = dma.done [#allocation4], 128
    $region41: #{tpu_custom_call.1} parent=1 // pred_fallthru
      _
    %647 = vsyncpa [#allocation3], 1
    %648 = vsyncpa [#allocation6], 1
    %649 = vsyncpa [#allocation9], 1
    %650 = vsyncpa [#allocation4], 1

</llo_original>
